<compile_context>
chip_gen: v6e
topology: v6e:2x2x1
jax: 0.10.0
libtpu: 0.0.40
codegen_flags: <defaults>
</compile_context>

<pallas_src>
import jax
import jax.numpy as jnp
from jax import lax
from jax.experimental import pallas as pl
from jax.experimental.pallas import tpu as pltpu


def _round_up(n, m):
    return ((n + m - 1) // m) * m


def _batch_tile(batch, block_batch):
    """Batch tile: multiple of 8 (f32 sublane quantum), chosen to minimize
    tail padding rather than always taking the cap."""
    n_tiles = max(1, -(-batch // block_batch))
    tb = -(-batch // n_tiles)
    return _round_up(tb, 8)


def _mlp_layers(x, wb_refs):
    """Run the MLP on one x tile. wb_refs = [w0, b0, w1, b1, ...] VMEM refs.
    Weights are stored (in, out), biases (1, out). Returns f32 (tb, n_out)."""
    n_layers = len(wb_refs) // 2
    h = x
    for l in range(n_layers):
        w = wb_refs[2 * l][...]
        b = wb_refs[2 * l + 1][...]          # single read per step
        h = jnp.dot(h.astype(w.dtype), w,
                    preferred_element_type=jnp.float32) + b
        if l < n_layers - 1:                 # ReLU on hidden layers only
            h = jnp.maximum(h, 0.0)
    return h


def _make_forward_kernel(n_layers):
    del n_layers  # layer count is implied by the number of refs

    def kernel(*refs):
        x_ref, o_ref = refs[0], refs[-1]
        q = _mlp_layers(x_ref[...], refs[1:-1])
        o_ref[...] = q.astype(o_ref.dtype)

    return kernel


def _make_act_kernel(n_layers):
    del n_layers

    def kernel(*refs):
        x_ref, o_ref = refs[0], refs[-1]
        q = _mlp_layers(x_ref[...], refs[1:-1])          # (tb, n_actions) f32
        # Fused greedy action: argmax over the tiny action axis (first index
        # achieving the max), so q never hits HBM on the act() path.
        qmax = jnp.max(q, axis=-1, keepdims=True)
        idx = lax.broadcasted_iota(jnp.int32, q.shape, 1)
        sentinel = jnp.int32(q.shape[-1])
        act = jnp.min(jnp.where(q >= qmax, idx, sentinel),
                      axis=-1, keepdims=True)
        o_ref[...] = act

    return kernel


def _pallas_mlp(x, params, *, kernel_factory, out_dim, out_dtype, block_batch):
    batch, n_in = x.shape
    assert n_in == params[0][0].shape[0], "x feature dim mismatch"

    tb = _batch_tile(batch, block_batch)
    grid = (pl.cdiv(batch, tb),)

    const2d = lambda i: (0, 0)
    in_specs = [pl.BlockSpec((tb, n_in), lambda i: (i, 0))]   # streamed per tile
    args = [x]
    for w, b in params:
        in_specs.append(pl.BlockSpec(w.shape, const2d))       # VMEM-resident
        in_specs.append(pl.BlockSpec(b.shape, const2d))
        args += [w, b]

    return pl.pallas_call(
        kernel_factory(len(params)),
        out_shape=jax.ShapeDtypeStruct((batch, out_dim), out_dtype),
        grid=grid,
        in_specs=in_specs,
        out_specs=pl.BlockSpec((tb, out_dim), lambda i: (i, 0)),
        compiler_params=pltpu.CompilerParams(
            dimension_semantics=("parallel",)),
    )(*args)


def net_forward(x, params, *, block_batch=4096):
    """DQN Net.forward: params = [(w, b), ...] with w (in, out), b (1, out).
    Returns (batch, n_actions) in x.dtype (f32 by default)."""
    n_actions = params[-1][0].shape[1]
    return _pallas_mlp(x, params, kernel_factory=_make_forward_kernel,
                       out_dim=n_actions, out_dtype=x.dtype,
                       block_batch=block_batch)


def net_act(x, params, *, block_batch=4096):
    """Fused forward + greedy argmax. Returns int32 actions, shape (batch, 1)."""
    return _pallas_mlp(x, params, kernel_factory=_make_act_kernel,
                       out_dim=1, out_dtype=jnp.int32,
                       block_batch=block_batch)


def init_params(key, n_states, n_actions, hide_layers=(15, 8)):
    """Mirrors Net.__init__: weights ~ N(0, 0.1); biases keep the PyTorch
    Linear default U(-1/sqrt(fan_in), 1/sqrt(fan_in)). Weights stored
    transposed as (in, out) so each layer is y = x @ W + b."""
    dims = [n_states, *hide_layers, n_actions]
    params = []
    for i in range(len(dims) - 1):
        fan_in, fan_out = dims[i], dims[i + 1]
        key, kw, kb = jax.random.split(key, 3)
        w = 0.1 * jax.random.normal(kw, (fan_in, fan_out), dtype=jnp.float32)
        bound = 1.0 / (fan_in ** 0.5)
        b = jax.random.uniform(kb, (1, fan_out), minval=-bound, maxval=bound,
                               dtype=jnp.float32)
        params.append((w, b))
    return params


def reference_forward(x, params):
    h = x
    for w, b in params[:-1]:
        h = jnp.maximum(h @ w + b, 0.0)
    w, b = params[-1]
    return h @ w + b


if __name__ == "__main__":
    n_states, n_actions = 4, 2
    key = jax.random.PRNGKey(0)
    key, kx = jax.random.split(key)
    params = init_params(key, n_states, n_actions, hide_layers=(15, 8))

    # act()-style single-row input (latency path, grid=1, ragged block).
    x_one = jax.random.normal(kx, (1, n_states), dtype=jnp.float32)
    a_one = net_act(x_one, params)
    jax.block_until_ready(a_one)
    ref_one = jnp.argmax(reference_forward(x_one, params), axis=-1)
    assert a_one.shape == (1, 1)
    assert int(a_one[0, 0]) == int(ref_one[0])

    # Small aligned batch.
    key, kx1 = jax.random.split(key)
    x_small = jax.random.normal(kx1, (8, n_states), dtype=jnp.float32)
    out_small = net_forward(x_small, params)
    jax.block_until_ready(out_small)
    ref_small = reference_forward(x_small, params)
    assert out_small.shape == (8, n_actions)
    assert jnp.allclose(out_small, ref_small, atol=1e-5, rtol=1e-5)

    # Training-batch style: non-multiple-of-8 batch, single grid step with a
    # ragged tail (no wrapper-side pad or slice).
    key, kx2 = jax.random.split(key)
    x_big = jax.random.normal(kx2, (300, n_states), dtype=jnp.float32)
    out_big = net_forward(x_big, params)
    jax.block_until_ready(out_big)
    ref_big = reference_forward(x_big, params)
    assert out_big.shape == (300, n_actions)
    assert jnp.allclose(out_big, ref_big, atol=1e-5, rtol=1e-5)

    # Same batch forced onto multiple grid steps (exercises multi-tile ragged
    # tail, resident weights across steps, and the parallel batch axis).
    out_multi = net_forward(x_big, params, block_batch=64)
    jax.block_until_ready(out_multi)
    assert jnp.allclose(out_multi, ref_big, atol=1e-5, rtol=1e-5)

    # Fused argmax on the larger batch.
    acts = net_act(x_big, params)
    jax.block_until_ready(acts)
    ref_acts = jnp.argmax(ref_big, axis=-1)
    assert acts.shape == (300, 1)
    assert bool(jnp.all(acts[:, 0] == ref_acts))

    print("KERNEL_OK")
</pallas_src>

<mosaic_0001>
module attributes {stable_mosaic.version = 11 : i64} {
  func.func @kernel(%arg0: i32, %arg1: memref<8x4xf32, #tpu.memory_space<vmem>>, %arg2: memref<4x15xf32, #tpu.memory_space<vmem>>, %arg3: memref<1x15xf32, #tpu.memory_space<vmem>>, %arg4: memref<15x8xf32, #tpu.memory_space<vmem>>, %arg5: memref<1x8xf32, #tpu.memory_space<vmem>>, %arg6: memref<8x2xf32, #tpu.memory_space<vmem>>, %arg7: memref<1x2xf32, #tpu.memory_space<vmem>>, %arg8: memref<8x1xi32, #tpu.memory_space<vmem>>) attributes {dimension_semantics = [#tpu.dimension_semantics<parallel>], iteration_bounds = array<i64: 1>, scalar_prefetch = 0 : i64, scratch_operands = 0 : i64, tpu.core_type = #tpu.core_type<tc>, window_params = [{transform_indices = @transform_0, window_bounds = array<i64: 8, 4>}, {pipeline_mode = #tpu.pipeline_mode<synchronous>, transform_indices = @transform_1, window_bounds = array<i64: 4, 15>}, {pipeline_mode = #tpu.pipeline_mode<synchronous>, transform_indices = @transform_2, window_bounds = array<i64: 1, 15>}, {pipeline_mode = #tpu.pipeline_mode<synchronous>, transform_indices = @transform_3, window_bounds = array<i64: 15, 8>}, {pipeline_mode = #tpu.pipeline_mode<synchronous>, transform_indices = @transform_4, window_bounds = array<i64: 1, 8>}, {pipeline_mode = #tpu.pipeline_mode<synchronous>, transform_indices = @transform_5, window_bounds = array<i64: 8, 2>}, {pipeline_mode = #tpu.pipeline_mode<synchronous>, transform_indices = @transform_6, window_bounds = array<i64: 1, 2>}, {transform_indices = @transform_7, window_bounds = array<i64: 8, 1>}]} {
    %c0 = arith.constant 0 : index
    %c0_0 = arith.constant 0 : index
    %0 = vector.load %arg1[%c0, %c0_0] : memref<8x4xf32, #tpu.memory_space<vmem>>, vector<8x4xf32>
    %c0_1 = arith.constant 0 : index
    %c0_2 = arith.constant 0 : index
    %1 = vector.load %arg2[%c0_1, %c0_2] : memref<4x15xf32, #tpu.memory_space<vmem>>, vector<4x15xf32>
    %c0_3 = arith.constant 0 : index
    %c0_4 = arith.constant 0 : index
    %2 = vector.load %arg3[%c0_3, %c0_4] : memref<1x15xf32, #tpu.memory_space<vmem>>, vector<1x15xf32>
    %cst = arith.constant dense<0.000000e+00> : vector<8x15xf32>
    %3 = tpu.matmul %0, %1, %cst {dimension_numbers = #tpu.dot_dimension_numbers<[1], [0], [0], [1], [0, 0, 1, 1], [], []>} : vector<8x4xf32>, vector<4x15xf32>, vector<8x15xf32> -> vector<8x15xf32>
    %4 = vector.broadcast %2 : vector<1x15xf32> to vector<8x15xf32>
    %5 = arith.addf %3, %4 : vector<8x15xf32>
    %cst_5 = arith.constant 0.000000e+00 : f32
    %6 = vector.broadcast %cst_5 : f32 to vector<8x15xf32>
    %7 = arith.maximumf %5, %6 : vector<8x15xf32>
    %c0_6 = arith.constant 0 : index
    %c0_7 = arith.constant 0 : index
    %8 = vector.load %arg4[%c0_6, %c0_7] : memref<15x8xf32, #tpu.memory_space<vmem>>, vector<15x8xf32>
    %c0_8 = arith.constant 0 : index
    %c0_9 = arith.constant 0 : index
    %9 = vector.load %arg5[%c0_8, %c0_9] : memref<1x8xf32, #tpu.memory_space<vmem>>, vector<1x8xf32>
    %cst_10 = arith.constant dense<0.000000e+00> : vector<8x8xf32>
    %10 = tpu.matmul %7, %8, %cst_10 {dimension_numbers = #tpu.dot_dimension_numbers<[1], [0], [0], [1], [0, 0, 1, 1], [], []>} : vector<8x15xf32>, vector<15x8xf32>, vector<8x8xf32> -> vector<8x8xf32>
    %11 = vector.broadcast %9 : vector<1x8xf32> to vector<8x8xf32>
    %12 = arith.addf %10, %11 : vector<8x8xf32>
    %cst_11 = arith.constant 0.000000e+00 : f32
    %13 = vector.broadcast %cst_11 : f32 to vector<8x8xf32>
    %14 = arith.maximumf %12, %13 : vector<8x8xf32>
    %c0_12 = arith.constant 0 : index
    %c0_13 = arith.constant 0 : index
    %15 = vector.load %arg6[%c0_12, %c0_13] : memref<8x2xf32, #tpu.memory_space<vmem>>, vector<8x2xf32>
    %c0_14 = arith.constant 0 : index
    %c0_15 = arith.constant 0 : index
    %16 = vector.load %arg7[%c0_14, %c0_15] : memref<1x2xf32, #tpu.memory_space<vmem>>, vector<1x2xf32>
    %cst_16 = arith.constant dense<0.000000e+00> : vector<8x2xf32>
    %17 = tpu.matmul %14, %15, %cst_16 {dimension_numbers = #tpu.dot_dimension_numbers<[1], [0], [0], [1], [0, 0, 1, 1], [], []>} : vector<8x8xf32>, vector<8x2xf32>, vector<8x2xf32> -> vector<8x2xf32>
    %18 = vector.broadcast %16 : vector<1x2xf32> to vector<8x2xf32>
    %19 = arith.addf %17, %18 : vector<8x2xf32>
    %cst_17 = arith.constant dense<0xFF800000> : vector<8xf32>
    %20 = vector.multi_reduction <maximumf>, %19, %cst_17 [1] : vector<8x2xf32> to vector<8xf32>
    %21 = vector.shape_cast %20 : vector<8xf32> to vector<8x1xf32>
    %22 = tpu.iota {dimensions = array<i32: 1>} : vector<8x2xi32>
    %23 = vector.broadcast %21 : vector<8x1xf32> to vector<8x2xf32>
    %24 = arith.cmpf oge, %19, %23 : vector<8x2xf32>
    %c2_i32 = arith.constant 2 : i32
    %25 = vector.broadcast %c2_i32 : i32 to vector<8x2xi32>
    %26 = arith.select %24, %22, %25 : vector<8x2xi1>, vector<8x2xi32>
    %cst_18 = arith.constant dense<2147483647> : vector<8xi32>
    %27 = vector.multi_reduction <minsi>, %26, %cst_18 [1] : vector<8x2xi32> to vector<8xi32>
    %28 = vector.shape_cast %27 : vector<8xi32> to vector<8x1xi32>
    %c0_19 = arith.constant 0 : index
    %c0_20 = arith.constant 0 : index
    %29 = vector.load %arg8[%c0_19, %c0_20] : memref<8x1xi32, #tpu.memory_space<vmem>>, vector<8x1xi32>
    tpu.vector_store %arg8[%c0_19, %c0_20], %28 {strides = array<i32>} : memref<8x1xi32, #tpu.memory_space<vmem>>, vector<8x1xi32>,
    return
  }
  func.func @transform_0(%arg0: i32) -> (i32, i32) {
    %c0_i32 = arith.constant 0 : i32
    %c0_i32_0 = arith.constant 0 : i32
    return %arg0, %c0_i32 : i32, i32
  }
  func.func @transform_1(%arg0: i32) -> (i32, i32) {
    %c0_i32 = arith.constant 0 : i32
    %c0_i32_0 = arith.constant 0 : i32
    %c0_i32_1 = arith.constant 0 : i32
    return %c0_i32, %c0_i32_0 : i32, i32
  }
  func.func @transform_2(%arg0: i32) -> (i32, i32) {
    %c0_i32 = arith.constant 0 : i32
    %c0_i32_0 = arith.constant 0 : i32
    %c0_i32_1 = arith.constant 0 : i32
    return %c0_i32, %c0_i32_0 : i32, i32
  }
  func.func @transform_3(%arg0: i32) -> (i32, i32) {
    %c0_i32 = arith.constant 0 : i32
    %c0_i32_0 = arith.constant 0 : i32
    %c0_i32_1 = arith.constant 0 : i32
    return %c0_i32, %c0_i32_0 : i32, i32
  }
  func.func @transform_4(%arg0: i32) -> (i32, i32) {
    %c0_i32 = arith.constant 0 : i32
    %c0_i32_0 = arith.constant 0 : i32
    %c0_i32_1 = arith.constant 0 : i32
    return %c0_i32, %c0_i32_0 : i32, i32
  }
  func.func @transform_5(%arg0: i32) -> (i32, i32) {
    %c0_i32 = arith.constant 0 : i32
    %c0_i32_0 = arith.constant 0 : i32
    %c0_i32_1 = arith.constant 0 : i32
    return %c0_i32, %c0_i32_0 : i32, i32
  }
  func.func @transform_6(%arg0: i32) -> (i32, i32) {
    %c0_i32 = arith.constant 0 : i32
    %c0_i32_0 = arith.constant 0 : i32
    %c0_i32_1 = arith.constant 0 : i32
    return %c0_i32, %c0_i32_0 : i32, i32
  }
  func.func @transform_7(%arg0: i32) -> (i32, i32) {
    %c0_i32 = arith.constant 0 : i32
    %c0_i32_0 = arith.constant 0 : i32
    return %arg0, %c0_i32 : i32, i32
  }
}

</mosaic_0001>

<llo_original>
// kernel: tpu_custom_call.1
$region0: #{tpu_custom_call.1}
  #allocation0 [shape = 'u32[]', space=smem, size = 0x4, offset = 0x4, fixed_abs, tag = 'smem constant byte address 0x4 - core index']
  #allocation1 [shape = 'u32[144,128]{1,0:T(1,128)}', space=vmem, size = 0x12000, scoped, tag = 'internal scratch']
  %s0 = inlined_call_operand.vmem [shape: f32[1,4], index: 0, kind: input, shape index: {}]
  %s1 = inlined_call_operand.vmem [shape: f32[4,15], index: 1, kind: input, shape index: {}]
  %s2 = inlined_call_operand.vmem [shape: f32[1,15], index: 2, kind: input, shape index: {}]
  %s3 = inlined_call_operand.vmem [shape: f32[15,8], index: 3, kind: input, shape index: {}]
  %s4 = inlined_call_operand.vmem [shape: f32[1,8], index: 4, kind: input, shape index: {}]
  %s5 = inlined_call_operand.vmem [shape: f32[8,2], index: 5, kind: input, shape index: {}]
  %s6 = inlined_call_operand.vmem [shape: f32[1,2], index: 6, kind: input, shape index: {}]
  %s7 = inlined_call_operand.hbm [shape: s32[1,1], index: 7, kind: output, shape index: {}]
  %s8 = sld [smem:[#allocation0]]
  $region38: #{tpu_custom_call.1} parent=0
    _
  %s10 = ssub.s32 1, %s8
  %s11 = scalar_select 0, %s10, %s8
  $region1: #{tpu_custom_call.1} parent=0
    #allocation2 [shape = 'u8[4096]{0}', space=vmem, size = 0x1000, scoped, tag = 'output window, operand 0, single buffered']
    #allocation3 [shape = 's32[1]{0}', space=sflag, size = 0x4, scoped, tag = 'scoped memory for tpu_custom_call.1']
    %12 = vsyncpa [#allocation3], 0
    // Predicated region
    $region2: #{tpu_custom_call.1} parent=1 // pred_check
      _
    $region3: #{tpu_custom_call.1} parent=1 // pred_check_branch
      %14 = sbr.rel (0) target = $region5
    $region4: #{tpu_custom_call.1} parent=1 // pred_region
      _
    $region5: #{tpu_custom_call.1} parent=1 // pred_fallthru
      _
    // Predicated region
    $region6: #{tpu_custom_call.1} parent=1 // pred_check
      _
    $region7: #{tpu_custom_call.1} parent=1 // pred_check_branch
      %16 = sbr.rel (0) target = $region9
    $region8: #{tpu_custom_call.1} parent=1 // pred_region
      _
    $region9: #{tpu_custom_call.1} parent=1 // pred_fallthru
      _
    // Predicated region
    $region10: #{tpu_custom_call.1} parent=1 // pred_check
      _
    $region11: #{tpu_custom_call.1} parent=1 // pred_check_branch
      %18 = sbr.rel (0) target = $region13
    $region12: #{tpu_custom_call.1} parent=1 // pred_region
      _
    $region13: #{tpu_custom_call.1} parent=1 // pred_fallthru
      _
    // Predicated region
    $region14: #{tpu_custom_call.1} parent=1 // pred_check
      _
    $region15: #{tpu_custom_call.1} parent=1 // pred_check_branch
      %20 = sbr.rel (0) target = $region17
    $region16: #{tpu_custom_call.1} parent=1 // pred_region
      _
    $region17: #{tpu_custom_call.1} parent=1 // pred_fallthru
      _
    // Predicated region
    $region18: #{tpu_custom_call.1} parent=1 // pred_check
      _
    $region19: #{tpu_custom_call.1} parent=1 // pred_check_branch
      %22 = sbr.rel (0) target = $region21
    $region20: #{tpu_custom_call.1} parent=1 // pred_region
      _
    $region21: #{tpu_custom_call.1} parent=1 // pred_fallthru
      _
    // Predicated region
    $region22: #{tpu_custom_call.1} parent=1 // pred_check
      _
    $region23: #{tpu_custom_call.1} parent=1 // pred_check_branch
      %24 = sbr.rel (0) target = $region25
    $region24: #{tpu_custom_call.1} parent=1 // pred_region
      _
    $region25: #{tpu_custom_call.1} parent=1 // pred_fallthru
      _
    // Predicated region
    $region26: #{tpu_custom_call.1} parent=1 // pred_check
      _
    $region27: #{tpu_custom_call.1} parent=1 // pred_check_branch
      %26 = sbr.rel (0) target = $region29
    $region28: #{tpu_custom_call.1} parent=1 // pred_region
      _
    $region29: #{tpu_custom_call.1} parent=1 // pred_fallthru
      _
    %v27 = vld [vmem:[%s0] sm:$0xff]
    %v28 = vld [vmem:[%s1] sm:$0xf]
    %v29 = vld [vmem:[%s2] sm:$0x1]
    %v31 = vlaneseq
    %v32 = vshrl.u32 %v31, 7
    %v33 = vsub.s32 0, %v32
    %v34 = vrot.slane %v29, %v33
    %vm36 = vcmask 31744
    %v38 = vsel %vm36, %v27, 0
    %vm40 = vcmask 1043456
    %v42 = vsel %vm40, %v28, 0
    %44 = vmatprep.subr.mxu0 0.0
    %45 = vmatpush1.msra.mxu0 0.0
    %46 = vmatprep.subr.mxu0 0.0
    %47 = vmatpush1.msra.mxu0 0.0
    %48 = vmatprep.subr.mxu0 0.0
    %49 = vmatpush1.msra.mxu0 0.0
    %50 = vmatprep.subr.mxu0 0.0
    %51 = vmatpush1.msra.mxu0 0.0
    %52 = vmatprep.subr.mxu0 0.0
    %53 = vmatpush1.msra.mxu0 0.0
    %54 = vmatprep.subr.mxu0 0.0
    %55 = vmatpush1.msra.mxu0 0.0
    %56 = vmatprep.subr.mxu0 0.0
    %57 = vmatpush1.msra.mxu0 0.0
    %58 = vmatprep.subr.mxu0 0.0
    %59 = vmatpush1.msra.mxu0 0.0
    %60 = vmatprep.subr.mxu0 0.0
    %61 = vmatpush1.msra.mxu0 0.0
    %62 = vmatprep.subr.mxu0 0.0
    %63 = vmatpush1.msra.mxu0 0.0
    %64 = vmatprep.subr.mxu0 0.0
    %65 = vmatpush1.msra.mxu0 0.0
    %66 = vmatprep.subr.mxu0 0.0
    %67 = vmatpush1.msra.mxu0 0.0
    %68 = vmatprep.subr.mxu0 0.0
    %69 = vmatpush1.msra.mxu0 0.0
    %70 = vmatprep.subr.mxu0 0.0
    %71 = vmatpush1.msra.mxu0 0.0
    %72 = vmatprep.subr.mxu0 0.0
    %73 = vmatpush1.msra.mxu0 0.0
    %74 = vmatprep.subr.mxu0 0.0
    %75 = vmatpush1.msra.mxu0 %v42
    %76 = vmatprep.subr.mxu0 0.0
    %77 = vmatpush2.msra.mxu0 0.0
    %78 = vmatprep.subr.mxu0 0.0
    %79 = vmatpush2.msra.mxu0 0.0
    %80 = vmatprep.subr.mxu0 0.0
    %81 = vmatpush2.msra.mxu0 0.0
    %82 = vmatprep.subr.mxu0 0.0
    %83 = vmatpush2.msra.mxu0 0.0
    %84 = vmatprep.subr.mxu0 0.0
    %85 = vmatpush2.msra.mxu0 0.0
    %86 = vmatprep.subr.mxu0 0.0
    %87 = vmatpush2.msra.mxu0 0.0
    %88 = vmatprep.subr.mxu0 0.0
    %89 = vmatpush2.msra.mxu0 0.0
    %90 = vmatprep.subr.mxu0 0.0
    %91 = vmatpush2.msra.mxu0 0.0
    %92 = vmatprep.subr.mxu0 0.0
    %93 = vmatpush2.msra.mxu0 0.0
    %94 = vmatprep.subr.mxu0 0.0
    %95 = vmatpush2.msra.mxu0 0.0
    %96 = vmatprep.subr.mxu0 0.0
    %97 = vmatpush2.msra.mxu0 0.0
    %98 = vmatprep.subr.mxu0 0.0
    %99 = vmatpush2.msra.mxu0 0.0
    %100 = vmatprep.subr.mxu0 0.0
    %101 = vmatpush2.msra.mxu0 0.0
    %102 = vmatprep.subr.mxu0 0.0
    %103 = vmatpush2.msra.mxu0 0.0
    %104 = vmatprep.subr.mxu0 0.0
    %105 = vmatpush2.msra.mxu0 0.0
    %106 = vmatprep.subr.mxu0 0.0
    %107 = vmatpush2.msra.mxu0 0.0
    %108 = vmatprep.mubr.f32.mxu0 0.0
    %109 = vmatmul.mubr.f32.gmra.mxu0 %v38
    %v110 = vpop.f32.mrf.mxu0
    %v111 = vadd.f32 %v34, %v110
    %v112 = vpop.f32.mrf.mxu0
    %113 = vdwg.mxu0
    %v114 = vmax.f32 %v111, 0.0
    %v115 = vld [vmem:[%s3] sm:$0xff]
    %v116 = vld [vmem:[%s3 + $0x8] sm:$0x7f]
    %v117 = vld [vmem:[%s4] sm:$0x1]
    %v119 = vlaneseq
    %v120 = vshrl.u32 %v119, 7
    %v121 = vsub.s32 0, %v120
    %v122 = vrot.slane %v117, %v121
    %vm124 = vcmask 121856
    %v126 = vsel %vm124, %v114, 0
    %vm128 = vcmask 1046528
    %v130 = vsel %vm128, %v116, 0
    %132 = vmatprep.subr.mxu0 0.0
    %133 = vmatpush1.msra.mxu0 0.0
    %134 = vmatprep.subr.mxu0 0.0
    %135 = vmatpush1.msra.mxu0 0.0
    %136 = vmatprep.subr.mxu0 0.0
    %137 = vmatpush1.msra.mxu0 0.0
    %138 = vmatprep.subr.mxu0 0.0
    %139 = vmatpush1.msra.mxu0 0.0
    %140 = vmatprep.subr.mxu0 0.0
    %141 = vmatpush1.msra.mxu0 0.0
    %142 = vmatprep.subr.mxu0 0.0
    %143 = vmatpush1.msra.mxu0 0.0
    %144 = vmatprep.subr.mxu0 0.0
    %145 = vmatpush1.msra.mxu0 0.0
    %146 = vmatprep.subr.mxu0 0.0
    %147 = vmatpush1.msra.mxu0 0.0
    %148 = vmatprep.subr.mxu0 0.0
    %149 = vmatpush1.msra.mxu0 0.0
    %150 = vmatprep.subr.mxu0 0.0
    %151 = vmatpush1.msra.mxu0 0.0
    %152 = vmatprep.subr.mxu0 0.0
    %153 = vmatpush1.msra.mxu0 0.0
    %154 = vmatprep.subr.mxu0 0.0
    %155 = vmatpush1.msra.mxu0 0.0
    %156 = vmatprep.subr.mxu0 0.0
    %157 = vmatpush1.msra.mxu0 0.0
    %158 = vmatprep.subr.mxu0 0.0
    %159 = vmatpush1.msra.mxu0 0.0
    %160 = vmatprep.subr.mxu0 0.0
    %161 = vmatpush1.msra.mxu0 %v130
    %162 = vmatprep.subr.mxu0 0.0
    %163 = vmatpush1.msra.mxu0 %v115
    %164 = vmatprep.subr.mxu0 0.0
    %165 = vmatpush2.msra.mxu0 0.0
    %166 = vmatprep.subr.mxu0 0.0
    %167 = vmatpush2.msra.mxu0 0.0
    %168 = vmatprep.subr.mxu0 0.0
    %169 = vmatpush2.msra.mxu0 0.0
    %170 = vmatprep.subr.mxu0 0.0
    %171 = vmatpush2.msra.mxu0 0.0
    %172 = vmatprep.subr.mxu0 0.0
    %173 = vmatpush2.msra.mxu0 0.0
    %174 = vmatprep.subr.mxu0 0.0
    %175 = vmatpush2.msra.mxu0 0.0
    %176 = vmatprep.subr.mxu0 0.0
    %177 = vmatpush2.msra.mxu0 0.0
    %178 = vmatprep.subr.mxu0 0.0
    %179 = vmatpush2.msra.mxu0 0.0
    %180 = vmatprep.subr.mxu0 0.0
    %181 = vmatpush2.msra.mxu0 0.0
    %182 = vmatprep.subr.mxu0 0.0
    %183 = vmatpush2.msra.mxu0 0.0
    %184 = vmatprep.subr.mxu0 0.0
    %185 = vmatpush2.msra.mxu0 0.0
    %186 = vmatprep.subr.mxu0 0.0
    %187 = vmatpush2.msra.mxu0 0.0
    %188 = vmatprep.subr.mxu0 0.0
    %189 = vmatpush2.msra.mxu0 0.0
    %190 = vmatprep.subr.mxu0 0.0
    %191 = vmatpush2.msra.mxu0 0.0
    %192 = vmatprep.subr.mxu0 0.0
    %193 = vmatpush2.msra.mxu0 0.0
    %194 = vmatprep.subr.mxu0 0.0
    %195 = vmatpush2.msra.mxu0 0.0
    %196 = vmatprep.mubr.f32.mxu0 0.0
    %197 = vmatmul.mubr.f32.gmra.mxu0 %v126
    %v198 = vpop.f32.mrf.mxu0
    %v199 = vadd.f32 %v122, %v198
    %v200 = vpop.f32.mrf.mxu0
    %201 = vdwg.mxu0
    %v202 = vmax.f32 %v199, 0.0
    %v203 = vld [vmem:[%s5] sm:$0xff]
    %v204 = vld [vmem:[%s6] sm:$0x1]
    %v206 = vlaneseq
    %v207 = vshrl.u32 %v206, 7
    %v208 = vsub.s32 0, %v207
    %v209 = vrot.slane %v204, %v208
    %vm211 = vcmask 64512
    %v213 = vsel %vm211, %v202, 0
    %215 = vmatprep.subr.mxu0 0.0
    %216 = vmatpush1.msra.mxu0 0.0
    %217 = vmatprep.subr.mxu0 0.0
    %218 = vmatpush1.msra.mxu0 0.0
    %219 = vmatprep.subr.mxu0 0.0
    %220 = vmatpush1.msra.mxu0 0.0
    %221 = vmatprep.subr.mxu0 0.0
    %222 = vmatpush1.msra.mxu0 0.0
    %223 = vmatprep.subr.mxu0 0.0
    %224 = vmatpush1.msra.mxu0 0.0
    %225 = vmatprep.subr.mxu0 0.0
    %226 = vmatpush1.msra.mxu0 0.0
    %227 = vmatprep.subr.mxu0 0.0
    %228 = vmatpush1.msra.mxu0 0.0
    %229 = vmatprep.subr.mxu0 0.0
    %230 = vmatpush1.msra.mxu0 0.0
    %231 = vmatprep.subr.mxu0 0.0
    %232 = vmatpush1.msra.mxu0 0.0
    %233 = vmatprep.subr.mxu0 0.0
    %234 = vmatpush1.msra.mxu0 0.0
    %235 = vmatprep.subr.mxu0 0.0
    %236 = vmatpush1.msra.mxu0 0.0
    %237 = vmatprep.subr.mxu0 0.0
    %238 = vmatpush1.msra.mxu0 0.0
    %239 = vmatprep.subr.mxu0 0.0
    %240 = vmatpush1.msra.mxu0 0.0
    %241 = vmatprep.subr.mxu0 0.0
    %242 = vmatpush1.msra.mxu0 0.0
    %243 = vmatprep.subr.mxu0 0.0
    %244 = vmatpush1.msra.mxu0 0.0
    %245 = vmatprep.subr.mxu0 0.0
    %246 = vmatpush1.msra.mxu0 %v203
    %247 = vmatprep.subr.mxu0 0.0
    %248 = vmatpush2.msra.mxu0 0.0
    %249 = vmatprep.subr.mxu0 0.0
    %250 = vmatpush2.msra.mxu0 0.0
    %251 = vmatprep.subr.mxu0 0.0
    %252 = vmatpush2.msra.mxu0 0.0
    %253 = vmatprep.subr.mxu0 0.0
    %254 = vmatpush2.msra.mxu0 0.0
    %255 = vmatprep.subr.mxu0 0.0
    %256 = vmatpush2.msra.mxu0 0.0
    %257 = vmatprep.subr.mxu0 0.0
    %258 = vmatpush2.msra.mxu0 0.0
    %259 = vmatprep.subr.mxu0 0.0
    %260 = vmatpush2.msra.mxu0 0.0
    %261 = vmatprep.subr.mxu0 0.0
    %262 = vmatpush2.msra.mxu0 0.0
    %263 = vmatprep.subr.mxu0 0.0
    %264 = vmatpush2.msra.mxu0 0.0
    %265 = vmatprep.subr.mxu0 0.0
    %266 = vmatpush2.msra.mxu0 0.0
    %267 = vmatprep.subr.mxu0 0.0
    %268 = vmatpush2.msra.mxu0 0.0
    %269 = vmatprep.subr.mxu0 0.0
    %270 = vmatpush2.msra.mxu0 0.0
    %271 = vmatprep.subr.mxu0 0.0
    %272 = vmatpush2.msra.mxu0 0.0
    %273 = vmatprep.subr.mxu0 0.0
    %274 = vmatpush2.msra.mxu0 0.0
    %275 = vmatprep.subr.mxu0 0.0
    %276 = vmatpush2.msra.mxu0 0.0
    %277 = vmatprep.subr.mxu0 0.0
    %278 = vmatpush2.msra.mxu0 0.0
    %279 = vmatprep.mubr.f32.mxu0 0.0
    %280 = vmatmul.mubr.f32.gmra.mxu0 %v213
    %v281 = vpop.f32.mrf.mxu0
    %v282 = vadd.f32 %v209, %v281
    %v283 = vpop.f32.mrf.mxu0
    %284 = vdwg.mxu0
    %vm285 = vcmask 15360
    %v286 = vsel %vm285, %v282, -inf
    %287 = vmax.xlane.f32.xlu0 %v286
    %v288 = vpop.xlane.xlu0 %287
    %v289 = vlaneseq
    %v290 = vand.u32 %v289, 127
    %vm291 = vcmp.ge.f32.partialorder %v282, %v288
    %v292 = vsel %vm291, %v290, 2
    %v293 = vsel %vm285, %v292, 2147483647
    %v294 = vand.u32 %v293, 65535
    %v295 = vshra.s32 %v293, 16
    %v296 = vcvt.s32.f32 %v294
    %v297 = vcvt.s32.f32 %v295
    %298 = vmin.xlane.f32.xlu0 %v297
    %v299 = vpop.xlane.xlu0 %298
    %vm300 = vcmp.eq.f32.partialorder %v297, %v299
    %v301 = vsel %vm300, %v296, inf
    %302 = vmin.xlane.f32.xlu0 %v301
    %v303 = vpop.xlane.xlu0 %302
    %v304 = vcvt.f32.s32 %v303
    %v305 = vcvt.f32.s32 %v299
    %v306 = vshll.u32 %v305, 16
    %v307 = vadd.s32 %v306, %v304
    %vm308 = vcmask 7168
    %309 = vst.msk [vmem:[#allocation2] sm:$0xff] %vm308, %v307
    // Predicated region
    $region30: #{tpu_custom_call.1} parent=1 // pred_check
      _
    $region31: #{tpu_custom_call.1} parent=1 // pred_check_branch
      %311 = sbr.rel (0) target = $region33
    $region32: #{tpu_custom_call.1} parent=1 // pred_region
      %s313 = ssub.s32 128, 16
      %314 = vsyncadd [#allocation3], %s313
      %s315 = sshll.u32 [#allocation2], 4
      %s316 = int_to_ptr.vmem [resolvable:$true] %s315
      %321 = dma.vmem_to_hbm [thread:$0]  %s316, 16, %s7, [#allocation3], 16, 16, 1
    $region33: #{tpu_custom_call.1} parent=1 // pred_fallthru
      _
    // Predicated region
    $region34: #{tpu_custom_call.1} parent=1 // pred_check
      _
    $region35: #{tpu_custom_call.1} parent=1 // pred_check_branch
      %323 = sbr.rel (0) target = $region37
    $region36: #{tpu_custom_call.1} parent=1 // pred_region
      %324 = dma.done [#allocation3], 128
    $region37: #{tpu_custom_call.1} parent=1 // pred_fallthru
      _
    %325 = vsyncpa [#allocation3], 1

</llo_original>
